<compile_context>
chip_gen: v7x
topology: tpu7x:2x2x1
jax: 0.10.0
libtpu: 0.0.40
codegen_flags: <defaults>
</compile_context>

<pallas_src>
import functools

import jax
import jax.numpy as jnp
from jax.experimental import pallas as pl
from jax.experimental.pallas import tpu as pltpu


def _round_up(x, m):
    return ((x + m - 1) // m) * m


def _pad_to(x, shape):
    pads = [(0, t - s) for s, t in zip(x.shape, shape)]
    return jnp.pad(x, pads)


def _choose_block_b(B):
    """Batch-tile rows: minimize padding + grid-step overhead, and give v7x
    megacore >= 2 tiles once the batch is large enough to matter."""
    if B <= 256:
        return _round_up(B, 8)                      # single tile
    n_tiles = max(2, pl.cdiv(B, 1024))              # >= 2 tiles, <= 1024 rows each
    return _round_up(pl.cdiv(B, n_tiles), 8)


def _actor_kernel(max_action, h1p, h2p,
                  state_ref, w1_ref, w2_ref, w3_ref, b_ref, out_ref):
    # state tile: [TB, S] f32 (S = true state_dim, unpadded)
    x = state_ref[...].astype(jnp.bfloat16)

    b1 = b_ref[:, :h1p]                              # [1, 512] f32
    b2 = b_ref[:, h1p:h1p + h2p]                     # [1, 384] f32
    b3 = b_ref[:, h1p + h2p:]                        # [1, 128] f32

    # fc1 + relu  (bf16 x bf16 on the MXU, f32 accumulate)
    h1 = jnp.dot(x, w1_ref[...], preferred_element_type=jnp.float32)
    h1 = jnp.maximum(h1 + b1, 0.0)                   # [TB, 512] f32

    # fc2 + relu
    h2 = jnp.dot(h1.astype(jnp.bfloat16), w2_ref[...],
                 preferred_element_type=jnp.float32)
    h2 = jnp.maximum(h2 + b2, 0.0)                   # [TB, 384] f32

    # fc3 + max_action * tanh
    h3 = jnp.dot(h2.astype(jnp.bfloat16), w3_ref[...],
                 preferred_element_type=jnp.float32)
    out_ref[...] = max_action * jnp.tanh(h3 + b3)    # [TB, 128] f32


def prepare_actor_params(params):
    """One-time prep (hoisted out of the per-step forward): pad feature dims
    to lane multiples, cast weights to bf16, fuse biases into one f32 row.
    Zero padding is semantics-preserving (ReLU keeps padded lanes at 0)."""
    S, H1 = params["w1"].shape
    H2 = params["w2"].shape[1]
    A = params["w3"].shape[1]
    H1p, H2p, Ap = _round_up(H1, 128), _round_up(H2, 128), _round_up(A, 128)
    return {
        "w1": _pad_to(params["w1"], (S, H1p)).astype(jnp.bfloat16),
        "w2": _pad_to(params["w2"], (H1p, H2p)).astype(jnp.bfloat16),
        "w3": _pad_to(params["w3"], (H2p, Ap)).astype(jnp.bfloat16),
        "bias": jnp.concatenate(
            [_pad_to(params["b1"], (1, H1p)),
             _pad_to(params["b2"], (1, H2p)),
             _pad_to(params["b3"], (1, Ap))], axis=1).astype(jnp.float32),
    }


@functools.partial(jax.jit, static_argnames=("max_action", "action_dim"))
def actor_forward(state, prepped, max_action, action_dim):
    """state: [B, state_dim] f32.  prepped: output of prepare_actor_params."""
    B, S = state.shape
    H1p = prepped["w1"].shape[1]
    H2p = prepped["w2"].shape[1]
    Ap = prepped["w3"].shape[1]

    block_b = _choose_block_b(B)
    n_tiles = pl.cdiv(B, block_b)
    Bp = n_tiles * block_b
    state_p = state if Bp == B else jnp.pad(state, ((0, Bp - B), (0, 0)))

    kernel = functools.partial(_actor_kernel, float(max_action), H1p, H2p)

    out_p = pl.pallas_call(
        kernel,
        out_shape=jax.ShapeDtypeStruct((Bp, Ap), jnp.float32),
        grid_spec=pltpu.PrefetchScalarGridSpec(
            num_scalar_prefetch=0,
            grid=(n_tiles,),
            in_specs=[
                # state tile: last dim equals the full array dim (no 128-pad).
                pl.BlockSpec((block_b, S), lambda i: (i, 0)),
                # Weights/bias: constant index_map -> VMEM-resident across tiles.
                pl.BlockSpec((S, H1p), lambda i: (0, 0)),
                pl.BlockSpec((H1p, H2p), lambda i: (0, 0)),
                pl.BlockSpec((H2p, Ap), lambda i: (0, 0)),
                pl.BlockSpec((1, H1p + H2p + Ap), lambda i: (0, 0)),
            ],
            out_specs=pl.BlockSpec((block_b, Ap), lambda i: (i, 0)),
        ),
        compiler_params=pltpu.CompilerParams(
            dimension_semantics=("parallel",)),
    )(state_p, prepped["w1"], prepped["w2"], prepped["w3"], prepped["bias"])

    return out_p[:B, :action_dim]


def init_actor_params(key, state_dim, action_dim):
    """Deterministic init mimicking nn.Linear's U(-1/sqrt(fan_in), +1/sqrt(fan_in)).

    Weights are stored [in_features, out_features] (transposed vs PyTorch)."""
    dims = [(state_dim, 400), (400, 300), (300, action_dim)]
    params = {}
    for i, (fan_in, fan_out) in enumerate(dims, start=1):
        key, kw, kb = jax.random.split(key, 3)
        bound = 1.0 / jnp.sqrt(jnp.float32(fan_in))
        params[f"w{i}"] = jax.random.uniform(
            kw, (fan_in, fan_out), jnp.float32, -bound, bound)
        params[f"b{i}"] = jax.random.uniform(
            kb, (1, fan_out), jnp.float32, -bound, bound)
    return params


def actor_reference_f32(state, params, max_action):
    """Pure f32 reference (matches the PyTorch module exactly)."""
    x = jnp.maximum(state @ params["w1"] + params["b1"], 0.0)
    x = jnp.maximum(x @ params["w2"] + params["b2"], 0.0)
    return max_action * jnp.tanh(x @ params["w3"] + params["b3"])


def actor_reference_mixed(state, params, max_action):
    """Reference mirroring the kernel precision (bf16 matmul inputs, f32 acc)."""
    def layer(x, w, b):
        return jnp.dot(x.astype(jnp.bfloat16), w.astype(jnp.bfloat16),
                       preferred_element_type=jnp.float32) + b
    h1 = jnp.maximum(layer(state, params["w1"], params["b1"]), 0.0)
    h2 = jnp.maximum(layer(h1, params["w2"], params["b2"]), 0.0)
    return max_action * jnp.tanh(layer(h2, params["w3"], params["b3"]))


if __name__ == "__main__":
    key = jax.random.PRNGKey(0)
    batch, state_dim, action_dim = 2, 16, 8
    max_action = 2.0

    kp, kx = jax.random.split(key)
    params = init_actor_params(kp, state_dim, action_dim)
    state = jax.random.normal(kx, (batch, state_dim), jnp.float32)

    # One-time param prep (padding + bf16 cast hoisted out of the forward).
    prepped = jax.block_until_ready(prepare_actor_params(params))

    out = actor_forward(state, prepped, max_action, action_dim)
    out = jax.block_until_ready(out)
    assert out.shape == (batch, action_dim)

    # Tight check vs a reference using the same bf16-input / f32-accumulate math.
    ref_mixed = actor_reference_mixed(state, params, max_action)
    assert jnp.allclose(out, ref_mixed, atol=2e-3, rtol=2e-3)

    # Loose semantic check vs the pure-f32 PyTorch-equivalent forward.
    # (bf16 weight storage is an intentional, documented precision deviation.)
    ref_f32 = actor_reference_f32(state, params, max_action)
    assert jnp.allclose(out, ref_f32, atol=5e-2, rtol=5e-2)

    print("KERNEL_OK")
</pallas_src>

<mosaic_0001>
module attributes {stable_mosaic.version = 11 : i64} {
  func.func @_actor_kernel(%arg0: i32, %arg1: memref<8x16xf32, #tpu.memory_space<vmem>>, %arg2: memref<16x512xbf16, #tpu.memory_space<vmem>>, %arg3: memref<512x384xbf16, #tpu.memory_space<vmem>>, %arg4: memref<384x128xbf16, #tpu.memory_space<vmem>>, %arg5: memref<1x1024xf32, #tpu.memory_space<vmem>>, %arg6: memref<8x128xf32, #tpu.memory_space<vmem>>) attributes {dimension_semantics = [#tpu.dimension_semantics<parallel>], iteration_bounds = array<i64: 1>, scalar_prefetch = 0 : i64, scratch_operands = 0 : i64, tpu.core_type = #tpu.core_type<tc>, window_params = [{transform_indices = @transform_0, window_bounds = array<i64: 8, 16>}, {pipeline_mode = #tpu.pipeline_mode<synchronous>, transform_indices = @transform_1, window_bounds = array<i64: 16, 512>}, {pipeline_mode = #tpu.pipeline_mode<synchronous>, transform_indices = @transform_2, window_bounds = array<i64: 512, 384>}, {pipeline_mode = #tpu.pipeline_mode<synchronous>, transform_indices = @transform_3, window_bounds = array<i64: 384, 128>}, {pipeline_mode = #tpu.pipeline_mode<synchronous>, transform_indices = @transform_4, window_bounds = array<i64: 1, 1024>}, {transform_indices = @transform_5, window_bounds = array<i64: 8, 128>}]} {
    %c0 = arith.constant 0 : index
    %c0_0 = arith.constant 0 : index
    %0 = vector.load %arg1[%c0, %c0_0] : memref<8x16xf32, #tpu.memory_space<vmem>>, vector<8x16xf32>
    %1 = arith.truncf %0 : vector<8x16xf32> to vector<8x16xbf16>
    %c0_1 = arith.constant 0 : index
    %c0_2 = arith.constant 0 : index
    %2 = vector.load %arg5[%c0_1, %c0_2] : memref<1x1024xf32, #tpu.memory_space<vmem>>, vector<1x512xf32>
    %c0_3 = arith.constant 0 : index
    %c512 = arith.constant 512 : index
    %3 = vector.load %arg5[%c0_3, %c512] : memref<1x1024xf32, #tpu.memory_space<vmem>>, vector<1x384xf32>
    %c0_4 = arith.constant 0 : index
    %c896 = arith.constant 896 : index
    %4 = vector.load %arg5[%c0_4, %c896] : memref<1x1024xf32, #tpu.memory_space<vmem>>, vector<1x128xf32>
    %c0_5 = arith.constant 0 : index
    %c0_6 = arith.constant 0 : index
    %5 = vector.load %arg2[%c0_5, %c0_6] : memref<16x512xbf16, #tpu.memory_space<vmem>>, vector<16x512xbf16>
    %cst = arith.constant dense<0.000000e+00> : vector<8x512xf32>
    %6 = tpu.matmul %1, %5, %cst {dimension_numbers = #tpu.dot_dimension_numbers<[1], [0], [0], [1], [0, 0, 1, 1], [], []>} : vector<8x16xbf16>, vector<16x512xbf16>, vector<8x512xf32> -> vector<8x512xf32>
    %7 = vector.broadcast %2 : vector<1x512xf32> to vector<8x512xf32>
    %8 = arith.addf %6, %7 : vector<8x512xf32>
    %cst_7 = arith.constant 0.000000e+00 : f32
    %9 = vector.broadcast %cst_7 : f32 to vector<8x512xf32>
    %10 = arith.maximumf %8, %9 : vector<8x512xf32>
    %11 = arith.truncf %10 : vector<8x512xf32> to vector<8x512xbf16>
    %c0_8 = arith.constant 0 : index
    %c0_9 = arith.constant 0 : index
    %12 = vector.load %arg3[%c0_8, %c0_9] : memref<512x384xbf16, #tpu.memory_space<vmem>>, vector<512x384xbf16>
    %cst_10 = arith.constant dense<0.000000e+00> : vector<8x384xf32>
    %13 = tpu.matmul %11, %12, %cst_10 {dimension_numbers = #tpu.dot_dimension_numbers<[1], [0], [0], [1], [0, 0, 1, 1], [], []>} : vector<8x512xbf16>, vector<512x384xbf16>, vector<8x384xf32> -> vector<8x384xf32>
    %14 = vector.broadcast %3 : vector<1x384xf32> to vector<8x384xf32>
    %15 = arith.addf %13, %14 : vector<8x384xf32>
    %cst_11 = arith.constant 0.000000e+00 : f32
    %16 = vector.broadcast %cst_11 : f32 to vector<8x384xf32>
    %17 = arith.maximumf %15, %16 : vector<8x384xf32>
    %18 = arith.truncf %17 : vector<8x384xf32> to vector<8x384xbf16>
    %c0_12 = arith.constant 0 : index
    %c0_13 = arith.constant 0 : index
    %19 = vector.load %arg4[%c0_12, %c0_13] : memref<384x128xbf16, #tpu.memory_space<vmem>>, vector<384x128xbf16>
    %cst_14 = arith.constant dense<0.000000e+00> : vector<8x128xf32>
    %20 = tpu.matmul %18, %19, %cst_14 {dimension_numbers = #tpu.dot_dimension_numbers<[1], [0], [0], [1], [0, 0, 1, 1], [], []>} : vector<8x384xbf16>, vector<384x128xbf16>, vector<8x128xf32> -> vector<8x128xf32>
    %21 = vector.broadcast %4 : vector<1x128xf32> to vector<8x128xf32>
    %22 = arith.addf %20, %21 : vector<8x128xf32>
    %23 = math.tanh %22 : vector<8x128xf32>
    %cst_15 = arith.constant 2.000000e+00 : f32
    %24 = vector.broadcast %cst_15 : f32 to vector<8x128xf32>
    %25 = arith.mulf %24, %23 : vector<8x128xf32>
    %c0_16 = arith.constant 0 : index
    %c0_17 = arith.constant 0 : index
    %26 = vector.load %arg6[%c0_16, %c0_17] : memref<8x128xf32, #tpu.memory_space<vmem>>, vector<8x128xf32>
    tpu.vector_store %arg6[%c0_16, %c0_17], %25 {strides = array<i32>} : memref<8x128xf32, #tpu.memory_space<vmem>>, vector<8x128xf32>,
    return
  }
  func.func @transform_0(%arg0: i32) -> (i32, i32) {
    %c0_i32 = arith.constant 0 : i32
    %c0_i32_0 = arith.constant 0 : i32
    return %arg0, %c0_i32 : i32, i32
  }
  func.func @transform_1(%arg0: i32) -> (i32, i32) {
    %c0_i32 = arith.constant 0 : i32
    %c0_i32_0 = arith.constant 0 : i32
    %c0_i32_1 = arith.constant 0 : i32
    return %c0_i32, %c0_i32_0 : i32, i32
  }
  func.func @transform_2(%arg0: i32) -> (i32, i32) {
    %c0_i32 = arith.constant 0 : i32
    %c0_i32_0 = arith.constant 0 : i32
    %c0_i32_1 = arith.constant 0 : i32
    return %c0_i32, %c0_i32_0 : i32, i32
  }
  func.func @transform_3(%arg0: i32) -> (i32, i32) {
    %c0_i32 = arith.constant 0 : i32
    %c0_i32_0 = arith.constant 0 : i32
    %c0_i32_1 = arith.constant 0 : i32
    return %c0_i32, %c0_i32_0 : i32, i32
  }
  func.func @transform_4(%arg0: i32) -> (i32, i32) {
    %c0_i32 = arith.constant 0 : i32
    %c0_i32_0 = arith.constant 0 : i32
    %c0_i32_1 = arith.constant 0 : i32
    return %c0_i32, %c0_i32_0 : i32, i32
  }
  func.func @transform_5(%arg0: i32) -> (i32, i32) {
    %c0_i32 = arith.constant 0 : i32
    %c0_i32_0 = arith.constant 0 : i32
    return %arg0, %c0_i32 : i32, i32
  }
}

</mosaic_0001>

<llo_original>
// kernel: actor_forward.1
$region0: #{actor_forward.1}
  #allocation0 [shape = 'u32[]', space=smem, size = 0x4, offset = 0x4, fixed_abs, tag = 'smem constant byte address 0x4 - core index']
  #allocation1 [shape = 'u32[144,128]{1,0:T(1,128)}', space=vmem, size = 0x12000, scoped, tag = 'internal scratch']
  %s0 = inlined_call_operand.vmem [shape: f32[8,16], index: 0, kind: input, shape index: {}]
  %s1 = inlined_call_operand.hbm [shape: bf16[16,512], index: 1, kind: input, shape index: {}]
  %s2 = inlined_call_operand.hbm [shape: bf16[512,384], index: 2, kind: input, shape index: {}]
  %s3 = inlined_call_operand.hbm [shape: bf16[384,128], index: 3, kind: input, shape index: {}]
  %s4 = inlined_call_operand.vmem [shape: f32[1,1024], index: 4, kind: input, shape index: {}]
  %s5 = inlined_call_operand.vmem [shape: f32[8,128], index: 5, kind: output, shape index: {}]
  %s6 = sld [smem:[#allocation0]]
  $region42: #{actor_forward.1} parent=0
    _
  %s8 = ssub.s32 1, %s6
  %s9 = scalar_select 0, %s8, %s6
  $region1: #{actor_forward.1} parent=0
    #allocation2 [shape = 'u8[16384]{0}', space=vmem, size = 0x4000, scoped, tag = 'input window, operand 1, single buffered']
    #allocation3 [shape = 's32[1]{0}', space=sflag, size = 0x4, scoped, tag = 'scoped memory for actor_forward.1']
    #allocation4 [shape = 'u8[393216]{0}', space=vmem, size = 0x60000, scoped, tag = 'input window, operand 2, single buffered']
    #allocation5 [shape = 's32[1]{0}', space=sflag, size = 0x4, scoped, tag = 'scoped memory for actor_forward.1']
    #allocation6 [shape = 'u8[98304]{0}', space=vmem, size = 0x18000, scoped, tag = 'input window, operand 3, single buffered']
    %10 = vsyncpa [#allocation3], 0
    %11 = vsyncpa [#allocation5], 0
    // Predicated region
    $region2: #{actor_forward.1} parent=1 // pred_check
      _
    $region3: #{actor_forward.1} parent=1 // pred_check_branch
      %13 = sbr.rel (0) target = $region5
    $region4: #{actor_forward.1} parent=1 // pred_region
      _
    $region5: #{actor_forward.1} parent=1 // pred_fallthru
      _
    // Predicated region
    $region6: #{actor_forward.1} parent=1 // pred_check
      _
    $region7: #{actor_forward.1} parent=1 // pred_check_branch
      %15 = sbr.rel (0) target = $region9
    $region8: #{actor_forward.1} parent=1 // pred_region
      %s17 = ssub.s32 512, 512
      %18 = vsyncadd [#allocation3], %s17
      %s19 = sshll.u32 [#allocation2], 4
      %s20 = int_to_ptr.vmem [resolvable:$true] %s19
      %25 = dma.hbm_to_vmem [thread:$0]  %s1, 512, %s20, [#allocation3], 256, 256, 16
    $region9: #{actor_forward.1} parent=1 // pred_fallthru
      _
    // Predicated region
    $region10: #{actor_forward.1} parent=1 // pred_check
      _
    $region11: #{actor_forward.1} parent=1 // pred_check_branch
      %27 = sbr.rel (0) target = $region13
    $region12: #{actor_forward.1} parent=1 // pred_region
      %s29 = ssub.s32 12288, 12288
      %30 = vsyncadd [#allocation5], %s29
      %s31 = sshll.u32 [#allocation4], 4
      %s32 = int_to_ptr.vmem [resolvable:$true] %s31
      %37 = dma.hbm_to_vmem [thread:$0]  %s2, 12288, %s32, [#allocation5], 192, 192, 12
    $region13: #{actor_forward.1} parent=1 // pred_fallthru
      _
    // Predicated region
    $region14: #{actor_forward.1} parent=1 // pred_check
      _
    $region15: #{actor_forward.1} parent=1 // pred_check_branch
      %39 = sbr.rel (0) target = $region17
    $region16: #{actor_forward.1} parent=1 // pred_region
      %s41 = ssub.s32 3072, 3072
      %42 = vsyncadd [#allocation5], %s41
      %s43 = sshll.u32 [#allocation6], 4
      %s44 = int_to_ptr.vmem [resolvable:$true] %s43
      %49 = dma.hbm_to_vmem [thread:$0]  %s3, 3072, %s44, [#allocation5], 64, 64, 4
    $region17: #{actor_forward.1} parent=1 // pred_fallthru
      _
    // Predicated region
    $region18: #{actor_forward.1} parent=1 // pred_check
      _
    $region19: #{actor_forward.1} parent=1 // pred_check_branch
      %51 = sbr.rel (0) target = $region21
    $region20: #{actor_forward.1} parent=1 // pred_region
      _
    $region21: #{actor_forward.1} parent=1 // pred_fallthru
      _
    // Predicated region
    $region22: #{actor_forward.1} parent=1 // pred_check
      _
    $region23: #{actor_forward.1} parent=1 // pred_check_branch
      %53 = sbr.rel (0) target = $region25
    $region24: #{actor_forward.1} parent=1 // pred_region
      %54 = dma.done [#allocation3], 512
    $region25: #{actor_forward.1} parent=1 // pred_fallthru
      _
    // Predicated region
    $region26: #{actor_forward.1} parent=1 // pred_check
      _
    $region27: #{actor_forward.1} parent=1 // pred_check_branch
      %56 = sbr.rel (0) target = $region29
    $region28: #{actor_forward.1} parent=1 // pred_region
      %57 = dma.done [#allocation5], 12288
    $region29: #{actor_forward.1} parent=1 // pred_fallthru
      _
    // Predicated region
    $region30: #{actor_forward.1} parent=1 // pred_check
      _
    $region31: #{actor_forward.1} parent=1 // pred_check_branch
      %59 = sbr.rel (0) target = $region33
    $region32: #{actor_forward.1} parent=1 // pred_region
      %60 = dma.done [#allocation5], 3072
    $region33: #{actor_forward.1} parent=1 // pred_fallthru
      _
    %v62 = vld [vmem:[%s0] sm:$0xff]
    %v63 = vpack.c.bf16 %v62, %v62
    %v64 = vld [vmem:[%s4] sm:$0xf]
    %v65 = vld [vmem:[%s4 + $0x4] sm:$0x7]
    %v66 = vld [vmem:[%s4 + $0x7] sm:$0x1]
    %v67 = vld [vmem:[#allocation2] sm:$0xff]
    %v68 = vld [vmem:[#allocation2 + $0x8] sm:$0xff]
    %v69 = vld [vmem:[#allocation2 + $0x10] sm:$0xff]
    %v70 = vld [vmem:[#allocation2 + $0x18] sm:$0xff]
    %v72 = vlaneseq
    %v73 = vshrl.u32 %v72, 7
    %v74 = vsub.s32 0, %v73
    %v75 = vrot.slane %v64, %v74
    %v76 = vlaneseq
    %v77 = vshrl.u32 %v76, 7
    %v78 = vsub.s32 1, %v77
    %v79 = vrot.slane %v64, %v78
    %v80 = vlaneseq
    %v81 = vshrl.u32 %v80, 7
    %v82 = vsub.s32 2, %v81
    %v83 = vrot.slane %v64, %v82
    %v84 = vlaneseq
    %v85 = vshrl.u32 %v84, 7
    %v86 = vsub.s32 3, %v85
    %v87 = vrot.slane %v64, %v86
    %v96 = vunpack.c.l.b16 %v67
    %v97 = vunpack.c.h.b16 %v67
    %v98 = vunpack.c.l.b16 %v68
    %v99 = vunpack.c.h.b16 %v68
    %v100 = vunpack.c.l.b16 %v69
    %v101 = vunpack.c.h.b16 %v69
    %v102 = vunpack.c.l.b16 %v70
    %v103 = vunpack.c.h.b16 %v70
    %v104 = vpack.c.b16 %v100, %v96
    %v105 = vpack.c.b16 %v101, %v97
    %v106 = vpack.c.b16 %v102, %v98
    %v107 = vpack.c.b16 %v103, %v99
    %vm112 = vcmask 130048
    %v114 = vsel %vm112, %v63, 0
    %116 = vmatprep.subr.bf16.mxu0 %v105
    %117 = vmatpush1.bf16.msra.mxu0 %v104
    %118 = vmatprep.subr.bf16.mxu0 0
    %119 = vmatpush1.bf16.msra.mxu0 0
    %120 = vmatprep.subr.bf16.mxu0 0
    %121 = vmatpush1.bf16.msra.mxu0 0
    %122 = vmatprep.subr.bf16.mxu0 0
    %123 = vmatpush1.bf16.msra.mxu0 0
    %124 = vmatprep.subr.bf16.mxu0 0
    %125 = vmatpush1.bf16.msra.mxu0 0
    %126 = vmatprep.subr.bf16.mxu0 0
    %127 = vmatpush1.bf16.msra.mxu0 0
    %128 = vmatprep.subr.bf16.mxu0 0
    %129 = vmatpush1.bf16.msra.mxu0 0
    %130 = vmatprep.subr.bf16.mxu0 0
    %131 = vmatpush1.bf16.msra.mxu0 0
    %132 = vmatprep.subr.bf16.mxu0 0
    %133 = vmatpush1.bf16.msra.mxu0 0
    %134 = vmatprep.subr.bf16.mxu0 0
    %135 = vmatpush1.bf16.msra.mxu0 0
    %136 = vmatprep.subr.bf16.mxu0 0
    %137 = vmatpush1.bf16.msra.mxu0 0
    %138 = vmatprep.subr.bf16.mxu0 0
    %139 = vmatpush1.bf16.msra.mxu0 0
    %140 = vmatprep.subr.bf16.mxu0 0
    %141 = vmatpush1.bf16.msra.mxu0 0
    %142 = vmatprep.subr.bf16.mxu0 0
    %143 = vmatpush1.bf16.msra.mxu0 0
    %144 = vmatprep.subr.bf16.mxu0 0
    %145 = vmatpush1.bf16.msra.mxu0 0
    %146 = vmatprep.subr.bf16.mxu0 0
    %147 = vmatpush1.bf16.msra.mxu0 0
    %148 = vmatprep.mubr.bf16.mxu0 0
    %149 = vmatmul.mubr.bf16.gmra.mrb[0].mxu0 %v114
    %v150 = vpop.f32.mrb[0].mxu0
    %v151 = vadd.f32 %v75, %v150
    %v152 = vpop.f32.mrb[0].mxu0
    %v153 = vadd.f32 %v79, %v152
    %v154 = vpop.f32.mrb[0].mxu0
    %v155 = vpop.f32.mrb[0].mxu0
    %156 = vdwg.mxu0
    %157 = vmatprep.subr.bf16.mxu0 %v107
    %158 = vmatpush1.bf16.msra.mxu0 %v106
    %159 = vmatprep.subr.bf16.mxu0 0
    %160 = vmatpush1.bf16.msra.mxu0 0
    %161 = vmatprep.subr.bf16.mxu0 0
    %162 = vmatpush1.bf16.msra.mxu0 0
    %163 = vmatprep.subr.bf16.mxu0 0
    %164 = vmatpush1.bf16.msra.mxu0 0
    %165 = vmatprep.subr.bf16.mxu0 0
    %166 = vmatpush1.bf16.msra.mxu0 0
    %167 = vmatprep.subr.bf16.mxu0 0
    %168 = vmatpush1.bf16.msra.mxu0 0
    %169 = vmatprep.subr.bf16.mxu0 0
    %170 = vmatpush1.bf16.msra.mxu0 0
    %171 = vmatprep.subr.bf16.mxu0 0
    %172 = vmatpush1.bf16.msra.mxu0 0
    %173 = vmatprep.subr.bf16.mxu0 0
    %174 = vmatpush1.bf16.msra.mxu0 0
    %175 = vmatprep.subr.bf16.mxu0 0
    %176 = vmatpush1.bf16.msra.mxu0 0
    %177 = vmatprep.subr.bf16.mxu0 0
    %178 = vmatpush1.bf16.msra.mxu0 0
    %179 = vmatprep.subr.bf16.mxu0 0
    %180 = vmatpush1.bf16.msra.mxu0 0
    %181 = vmatprep.subr.bf16.mxu0 0
    %182 = vmatpush1.bf16.msra.mxu0 0
    %183 = vmatprep.subr.bf16.mxu0 0
    %184 = vmatpush1.bf16.msra.mxu0 0
    %185 = vmatprep.subr.bf16.mxu0 0
    %186 = vmatpush1.bf16.msra.mxu0 0
    %187 = vmatprep.subr.bf16.mxu0 0
    %188 = vmatpush1.bf16.msra.mxu0 0
    %189 = vmatprep.mubr.bf16.mxu0 0
    %190 = vmatmul.mubr.bf16.gmra.mrb[0].mxu0 %v114
    %v191 = vpop.f32.mrb[0].mxu0
    %v192 = vadd.f32 %v83, %v191
    %v193 = vpop.f32.mrb[0].mxu0
    %v194 = vadd.f32 %v87, %v193
    %v195 = vpop.f32.mrb[0].mxu0
    %v196 = vpop.f32.mrb[0].mxu0
    %197 = vdwg.mxu0
    %v198 = vmax.f32 %v151, 0.0
    %v199 = vmax.f32 %v153, 0.0
    %v200 = vmax.f32 %v192, 0.0
    %v201 = vmax.f32 %v194, 0.0
    %v202 = vpack.c.bf16 %v198, %v198
    %v203 = vpack.c.bf16 %v199, %v199
    %v204 = vpack.c.bf16 %v200, %v200
    %v205 = vpack.c.bf16 %v201, %v201
    %v206 = vld [vmem:[#allocation4] sm:$0xff]
    %v207 = vld [vmem:[#allocation4 + $0x8] sm:$0xf]
    %v208 = vld [vmem:[#allocation4 + $0xc] sm:$0xff]
    %v209 = vld [vmem:[#allocation4 + $0x14] sm:$0xf]
    %v210 = vld [vmem:[#allocation4 + $0x18] sm:$0xff]
    %v211 = vld [vmem:[#allocation4 + $0x20] sm:$0xf]
    %v212 = vld [vmem:[#allocation4 + $0x24] sm:$0xff]
    %v213 = vld [vmem:[#allocation4 + $0x2c] sm:$0xf]
    %v214 = vld [vmem:[#allocation4 + $0x30] sm:$0xff]
    %v215 = vld [vmem:[#allocation4 + $0x38] sm:$0xf]
    %v216 = vld [vmem:[#allocation4 + $0x3c] sm:$0xff]
    %v217 = vld [vmem:[#allocation4 + $0x44] sm:$0xf]
    %v218 = vld [vmem:[#allocation4 + $0x48] sm:$0xff]
    %v219 = vld [vmem:[#allocation4 + $0x50] sm:$0xf]
    %v220 = vld [vmem:[#allocation4 + $0x54] sm:$0xff]
    %v221 = vld [vmem:[#allocation4 + $0x5c] sm:$0xf]
    %v222 = vld [vmem:[#allocation4 + $0x60] sm:$0xff]
    %v223 = vld [vmem:[#allocation4 + $0x68] sm:$0xf]
    %v224 = vld [vmem:[#allocation4 + $0x6c] sm:$0xff]
    %v225 = vld [vmem:[#allocation4 + $0x74] sm:$0xf]
    %v226 = vld [vmem:[#allocation4 + $0x78] sm:$0xff]
    %v227 = vld [vmem:[#allocation4 + $0x80] sm:$0xf]
    %v228 = vld [vmem:[#allocation4 + $0x84] sm:$0xff]
    %v229 = vld [vmem:[#allocation4 + $0x8c] sm:$0xf]
    %v230 = vld [vmem:[#allocation4 + $0x90] sm:$0xff]
    %v231 = vld [vmem:[#allocation4 + $0x98] sm:$0xf]
    %v232 = vld [vmem:[#allocation4 + $0x9c] sm:$0xff]
    %v233 = vld [vmem:[#allocation4 + $0xa4] sm:$0xf]
    %v234 = vld [vmem:[#allocation4 + $0xa8] sm:$0xff]
    %v235 = vld [vmem:[#allocation4 + $0xb0] sm:$0xf]
    %v236 = vld [vmem:[#allocation4 + $0xb4] sm:$0xff]
    %v237 = vld [vmem:[#allocation4 + $0xbc] sm:$0xf]
    %v238 = vld [vmem:[#allocation4 + $0xc0] sm:$0xff]
    %v239 = vld [vmem:[#allocation4 + $0xc8] sm:$0xf]
    %v240 = vld [vmem:[#allocation4 + $0xcc] sm:$0xff]
    %v241 = vld [vmem:[#allocation4 + $0xd4] sm:$0xf]
    %v242 = vld [vmem:[#allocation4 + $0xd8] sm:$0xff]
    %v243 = vld [vmem:[#allocation4 + $0xe0] sm:$0xf]
    %v244 = vld [vmem:[#allocation4 + $0xe4] sm:$0xff]
    %v245 = vld [vmem:[#allocation4 + $0xec] sm:$0xf]
    %v246 = vld [vmem:[#allocation4 + $0xf0] sm:$0xff]
    %v247 = vld [vmem:[#allocation4 + $0xf8] sm:$0xf]
    %v248 = vld [vmem:[#allocation4 + $0xfc] sm:$0xff]
    %v249 = vld [vmem:[#allocation4 + $0x104] sm:$0xf]
    %v250 = vld [vmem:[#allocation4 + $0x108] sm:$0xff]
    %v251 = vld [vmem:[#allocation4 + $0x110] sm:$0xf]
    %v252 = vld [vmem:[#allocation4 + $0x114] sm:$0xff]
    %v253 = vld [vmem:[#allocation4 + $0x11c] sm:$0xf]
    %v254 = vld [vmem:[#allocation4 + $0x120] sm:$0xff]
    %v255 = vld [vmem:[#allocation4 + $0x128] sm:$0xf]
    %v256 = vld [vmem:[#allocation4 + $0x12c] sm:$0xff]
    %v257 = vld [vmem:[#allocation4 + $0x134] sm:$0xf]
    %v258 = vld [vmem:[#allocation4 + $0x138] sm:$0xff]
    %v259 = vld [vmem:[#allocation4 + $0x140] sm:$0xf]
    %v260 = vld [vmem:[#allocation4 + $0x144] sm:$0xff]
    %v261 = vld [vmem:[#allocation4 + $0x14c] sm:$0xf]
    %v262 = vld [vmem:[#allocation4 + $0x150] sm:$0xff]
    %v263 = vld [vmem:[#allocation4 + $0x158] sm:$0xf]
    %v264 = vld [vmem:[#allocation4 + $0x15c] sm:$0xff]
    %v265 = vld [vmem:[#allocation4 + $0x164] sm:$0xf]
    %v266 = vld [vmem:[#allocation4 + $0x168] sm:$0xff]
    %v267 = vld [vmem:[#allocation4 + $0x170] sm:$0xf]
    %v268 = vld [vmem:[#allocation4 + $0x174] sm:$0xff]
    %v269 = vld [vmem:[#allocation4 + $0x17c] sm:$0xf]
    %v270 = vld [vmem:[#allocation4 + $0x180] sm:$0xff]
    %v271 = vld [vmem:[#allocation4 + $0x188] sm:$0xf]
    %v272 = vld [vmem:[#allocation4 + $0x18c] sm:$0xff]
    %v273 = vld [vmem:[#allocation4 + $0x194] sm:$0xf]
    %v274 = vld [vmem:[#allocation4 + $0x198] sm:$0xff]
    %v275 = vld [vmem:[#allocation4 + $0x1a0] sm:$0xf]
    %v276 = vld [vmem:[#allocation4 + $0x1a4] sm:$0xff]
    %v277 = vld [vmem:[#allocation4 + $0x1ac] sm:$0xf]
    %v278 = vld [vmem:[#allocation4 + $0x1b0] sm:$0xff]
    %v279 = vld [vmem:[#allocation4 + $0x1b8] sm:$0xf]
    %v280 = vld [vmem:[#allocation4 + $0x1bc] sm:$0xff]
    %v281 = vld [vmem:[#allocation4 + $0x1c4] sm:$0xf]
    %v282 = vld [vmem:[#allocation4 + $0x1c8] sm:$0xff]
    %v283 = vld [vmem:[#allocation4 + $0x1d0] sm:$0xf]
    %v284 = vld [vmem:[#allocation4 + $0x1d4] sm:$0xff]
    %v285 = vld [vmem:[#allocation4 + $0x1dc] sm:$0xf]
    %v286 = vld [vmem:[#allocation4 + $0x1e0] sm:$0xff]
    %v287 = vld [vmem:[#allocation4 + $0x1e8] sm:$0xf]
    %v288 = vld [vmem:[#allocation4 + $0x1ec] sm:$0xff]
    %v289 = vld [vmem:[#allocation4 + $0x1f4] sm:$0xf]
    %v290 = vld [vmem:[#allocation4 + $0x1f8] sm:$0xff]
    %v291 = vld [vmem:[#allocation4 + $0x200] sm:$0xf]
    %v292 = vld [vmem:[#allocation4 + $0x204] sm:$0xff]
    %v293 = vld [vmem:[#allocation4 + $0x20c] sm:$0xf]
    %v294 = vld [vmem:[#allocation4 + $0x210] sm:$0xff]
    %v295 = vld [vmem:[#allocation4 + $0x218] sm:$0xf]
    %v296 = vld [vmem:[#allocation4 + $0x21c] sm:$0xff]
    %v297 = vld [vmem:[#allocation4 + $0x224] sm:$0xf]
    %v298 = vld [vmem:[#allocation4 + $0x228] sm:$0xff]
    %v299 = vld [vmem:[#allocation4 + $0x230] sm:$0xf]
    %v300 = vld [vmem:[#allocation4 + $0x234] sm:$0xff]
    %v301 = vld [vmem:[#allocation4 + $0x23c] sm:$0xf]
    %v302 = vld [vmem:[#allocation4 + $0x240] sm:$0xff]
    %v303 = vld [vmem:[#allocation4 + $0x248] sm:$0xf]
    %v304 = vld [vmem:[#allocation4 + $0x24c] sm:$0xff]
    %v305 = vld [vmem:[#allocation4 + $0x254] sm:$0xf]
    %v306 = vld [vmem:[#allocation4 + $0x258] sm:$0xff]
    %v307 = vld [vmem:[#allocation4 + $0x260] sm:$0xf]
    %v308 = vld [vmem:[#allocation4 + $0x264] sm:$0xff]
    %v309 = vld [vmem:[#allocation4 + $0x26c] sm:$0xf]
    %v310 = vld [vmem:[#allocation4 + $0x270] sm:$0xff]
    %v311 = vld [vmem:[#allocation4 + $0x278] sm:$0xf]
    %v312 = vld [vmem:[#allocation4 + $0x27c] sm:$0xff]
    %v313 = vld [vmem:[#allocation4 + $0x284] sm:$0xf]
    %v314 = vld [vmem:[#allocation4 + $0x288] sm:$0xff]
    %v315 = vld [vmem:[#allocation4 + $0x290] sm:$0xf]
    %v316 = vld [vmem:[#allocation4 + $0x294] sm:$0xff]
    %v317 = vld [vmem:[#allocation4 + $0x29c] sm:$0xf]
    %v318 = vld [vmem:[#allocation4 + $0x2a0] sm:$0xff]
    %v319 = vld [vmem:[#allocation4 + $0x2a8] sm:$0xf]
    %v320 = vld [vmem:[#allocation4 + $0x2ac] sm:$0xff]
    %v321 = vld [vmem:[#allocation4 + $0x2b4] sm:$0xf]
    %v322 = vld [vmem:[#allocation4 + $0x2b8] sm:$0xff]
    %v323 = vld [vmem:[#allocation4 + $0x2c0] sm:$0xf]
    %v324 = vld [vmem:[#allocation4 + $0x2c4] sm:$0xff]
    %v325 = vld [vmem:[#allocation4 + $0x2cc] sm:$0xf]
    %v326 = vld [vmem:[#allocation4 + $0x2d0] sm:$0xff]
    %v327 = vld [vmem:[#allocation4 + $0x2d8] sm:$0xf]
    %v328 = vld [vmem:[#allocation4 + $0x2dc] sm:$0xff]
    %v329 = vld [vmem:[#allocation4 + $0x2e4] sm:$0xf]
    %v330 = vld [vmem:[#allocation4 + $0x2e8] sm:$0xff]
    %v331 = vld [vmem:[#allocation4 + $0x2f0] sm:$0xf]
    %v332 = vld [vmem:[#allocation4 + $0x2f4] sm:$0xff]
    %v333 = vld [vmem:[#allocation4 + $0x2fc] sm:$0xf]
    %v335 = vlaneseq
    %v336 = vshrl.u32 %v335, 7
    %v337 = vsub.s32 0, %v336
    %v338 = vrot.slane %v65, %v337
    %v339 = vlaneseq
    %v340 = vshrl.u32 %v339, 7
    %v341 = vsub.s32 1, %v340
    %v342 = vrot.slane %v65, %v341
    %v343 = vlaneseq
    %v344 = vshrl.u32 %v343, 7
    %v345 = vsub.s32 2, %v344
    %v346 = vrot.slane %v65, %v345
    %v478 = vunpack.c.l.b16 %v206
    %v479 = vunpack.c.h.b16 %v206
    %v480 = vunpack.c.l.b16 %v207
    %v481 = vunpack.c.l.b16 %v208
    %v482 = vunpack.c.h.b16 %v208
    %v483 = vunpack.c.l.b16 %v209
    %v484 = vunpack.c.l.b16 %v210
    %v485 = vunpack.c.h.b16 %v210
    %v486 = vunpack.c.l.b16 %v211
    %v487 = vunpack.c.l.b16 %v212
    %v488 = vunpack.c.h.b16 %v212
    %v489 = vunpack.c.l.b16 %v213
    %v490 = vunpack.c.l.b16 %v214
    %v491 = vunpack.c.h.b16 %v214
    %v492 = vunpack.c.l.b16 %v215
    %v493 = vunpack.c.l.b16 %v216
    %v494 = vunpack.c.h.b16 %v216
    %v495 = vunpack.c.l.b16 %v217
    %v496 = vunpack.c.l.b16 %v218
    %v497 = vunpack.c.h.b16 %v218
    %v498 = vunpack.c.l.b16 %v219
    %v499 = vunpack.c.l.b16 %v220
    %v500 = vunpack.c.h.b16 %v220
    %v501 = vunpack.c.l.b16 %v221
    %v502 = vunpack.c.l.b16 %v222
    %v503 = vunpack.c.h.b16 %v222
    %v504 = vunpack.c.l.b16 %v223
    %v505 = vunpack.c.l.b16 %v224
    %v506 = vunpack.c.h.b16 %v224
    %v507 = vunpack.c.l.b16 %v225
    %v508 = vunpack.c.l.b16 %v226
    %v509 = vunpack.c.h.b16 %v226
    %v510 = vunpack.c.l.b16 %v227
    %v511 = vunpack.c.l.b16 %v228
    %v512 = vunpack.c.h.b16 %v228
    %v513 = vunpack.c.l.b16 %v229
    %v514 = vunpack.c.l.b16 %v230
    %v515 = vunpack.c.h.b16 %v230
    %v516 = vunpack.c.l.b16 %v231
    %v517 = vunpack.c.l.b16 %v232
    %v518 = vunpack.c.h.b16 %v232
    %v519 = vunpack.c.l.b16 %v233
    %v520 = vunpack.c.l.b16 %v234
    %v521 = vunpack.c.h.b16 %v234
    %v522 = vunpack.c.l.b16 %v235
    %v523 = vunpack.c.l.b16 %v236
    %v524 = vunpack.c.h.b16 %v236
    %v525 = vunpack.c.l.b16 %v237
    %v526 = vunpack.c.l.b16 %v238
    %v527 = vunpack.c.h.b16 %v238
    %v528 = vunpack.c.l.b16 %v239
    %v529 = vunpack.c.l.b16 %v240
    %v530 = vunpack.c.h.b16 %v240
    %v531 = vunpack.c.l.b16 %v241
    %v532 = vunpack.c.l.b16 %v242
    %v533 = vunpack.c.h.b16 %v242
    %v534 = vunpack.c.l.b16 %v243
    %v535 = vunpack.c.l.b16 %v244
    %v536 = vunpack.c.h.b16 %v244
    %v537 = vunpack.c.l.b16 %v245
    %v538 = vunpack.c.l.b16 %v246
    %v539 = vunpack.c.h.b16 %v246
    %v540 = vunpack.c.l.b16 %v247
    %v541 = vunpack.c.l.b16 %v248
    %v542 = vunpack.c.h.b16 %v248
    %v543 = vunpack.c.l.b16 %v249
    %v544 = vunpack.c.l.b16 %v250
    %v545 = vunpack.c.h.b16 %v250
    %v546 = vunpack.c.l.b16 %v251
    %v547 = vunpack.c.l.b16 %v252
    %v548 = vunpack.c.h.b16 %v252
    %v549 = vunpack.c.l.b16 %v253
    %v550 = vunpack.c.l.b16 %v254
    %v551 = vunpack.c.h.b16 %v254
    %v552 = vunpack.c.l.b16 %v255
    %v553 = vunpack.c.l.b16 %v256
    %v554 = vunpack.c.h.b16 %v256
    %v555 = vunpack.c.l.b16 %v257
    %v556 = vunpack.c.l.b16 %v258
    %v557 = vunpack.c.h.b16 %v258
    %v558 = vunpack.c.l.b16 %v259
    %v559 = vunpack.c.l.b16 %v260
    %v560 = vunpack.c.h.b16 %v260
    %v561 = vunpack.c.l.b16 %v261
    %v562 = vunpack.c.l.b16 %v262
    %v563 = vunpack.c.h.b16 %v262
    %v564 = vunpack.c.l.b16 %v263
    %v565 = vunpack.c.l.b16 %v264
    %v566 = vunpack.c.h.b16 %v264
    %v567 = vunpack.c.l.b16 %v265
    %v568 = vunpack.c.l.b16 %v266
    %v569 = vunpack.c.h.b16 %v266
    %v570 = vunpack.c.l.b16 %v267
    %v571 = vunpack.c.l.b16 %v268
    %v572 = vunpack.c.h.b16 %v268
    %v573 = vunpack.c.l.b16 %v269
    %v574 = vunpack.c.l.b16 %v270
    %v575 = vunpack.c.h.b16 %v270
    %v576 = vunpack.c.l.b16 %v271
    %v577 = vunpack.c.l.b16 %v272
    %v578 = vunpack.c.h.b16 %v272
    %v579 = vunpack.c.l.b16 %v273
    %v580 = vunpack.c.l.b16 %v274
    %v581 = vunpack.c.h.b16 %v274
    %v582 = vunpack.c.l.b16 %v275
    %v583 = vunpack.c.l.b16 %v276
    %v584 = vunpack.c.h.b16 %v276
    %v585 = vunpack.c.l.b16 %v277
    %v586 = vunpack.c.l.b16 %v278
    %v587 = vunpack.c.h.b16 %v278
    %v588 = vunpack.c.l.b16 %v279
    %v589 = vunpack.c.l.b16 %v280
    %v590 = vunpack.c.h.b16 %v280
    %v591 = vunpack.c.l.b16 %v281
    %v592 = vunpack.c.l.b16 %v282
    %v593 = vunpack.c.h.b16 %v282
    %v594 = vunpack.c.l.b16 %v283
    %v595 = vunpack.c.l.b16 %v284
    %v596 = vunpack.c.h.b16 %v284
    %v597 = vunpack.c.l.b16 %v285
    %v598 = vunpack.c.l.b16 %v286
    %v599 = vunpack.c.h.b16 %v286
    %v600 = vunpack.c.l.b16 %v287
    %v601 = vunpack.c.l.b16 %v288
    %v602 = vunpack.c.h.b16 %v288
    %v603 = vunpack.c.l.b16 %v289
    %v604 = vunpack.c.l.b16 %v290
    %v605 = vunpack.c.h.b16 %v290
    %v606 = vunpack.c.l.b16 %v291
    %v607 = vunpack.c.l.b16 %v292
    %v608 = vunpack.c.h.b16 %v292
    %v609 = vunpack.c.l.b16 %v293
    %v610 = vunpack.c.l.b16 %v294
    %v611 = vunpack.c.h.b16 %v294
    %v612 = vunpack.c.l.b16 %v295
    %v613 = vunpack.c.l.b16 %v296
    %v614 = vunpack.c.h.b16 %v296
    %v615 = vunpack.c.l.b16 %v297
    %v616 = vunpack.c.l.b16 %v298
    %v617 = vunpack.c.h.b16 %v298
    %v618 = vunpack.c.l.b16 %v299
    %v619 = vunpack.c.l.b16 %v300
    %v620 = vunpack.c.h.b16 %v300
    %v621 = vunpack.c.l.b16 %v301
    %v622 = vunpack.c.l.b16 %v302
    %v623 = vunpack.c.h.b16 %v302
    %v624 = vunpack.c.l.b16 %v303
    %v625 = vunpack.c.l.b16 %v304
    %v626 = vunpack.c.h.b16 %v304
    %v627 = vunpack.c.l.b16 %v305
    %v628 = vunpack.c.l.b16 %v306
    %v629 = vunpack.c.h.b16 %v306
    %v630 = vunpack.c.l.b16 %v307
    %v631 = vunpack.c.l.b16 %v308
    %v632 = vunpack.c.h.b16 %v308
    %v633 = vunpack.c.l.b16 %v309
    %v634 = vunpack.c.l.b16 %v310
    %v635 = vunpack.c.h.b16 %v310
    %v636 = vunpack.c.l.b16 %v311
    %v637 = vunpack.c.l.b16 %v312
    %v638 = vunpack.c.h.b16 %v312
    %v639 = vunpack.c.l.b16 %v313
    %v640 = vunpack.c.l.b16 %v314
    %v641 = vunpack.c.h.b16 %v314
    %v642 = vunpack.c.l.b16 %v315
    %v643 = vunpack.c.l.b16 %v316
    %v644 = vunpack.c.h.b16 %v316
    %v645 = vunpack.c.l.b16 %v317
    %v646 = vunpack.c.l.b16 %v318
    %v647 = vunpack.c.h.b16 %v318
    %v648 = vunpack.c.l.b16 %v319
    %v649 = vunpack.c.l.b16 %v320
    %v650 = vunpack.c.h.b16 %v320
    %v651 = vunpack.c.l.b16 %v321
    %v652 = vunpack.c.l.b16 %v322
    %v653 = vunpack.c.h.b16 %v322
    %v654 = vunpack.c.l.b16 %v323
    %v655 = vunpack.c.l.b16 %v324
    %v656 = vunpack.c.h.b16 %v324
    %v657 = vunpack.c.l.b16 %v325
    %v658 = vunpack.c.l.b16 %v326
    %v659 = vunpack.c.h.b16 %v326
    %v660 = vunpack.c.l.b16 %v327
    %v661 = vunpack.c.l.b16 %v328
    %v662 = vunpack.c.h.b16 %v328
    %v663 = vunpack.c.l.b16 %v329
    %v664 = vunpack.c.l.b16 %v330
    %v665 = vunpack.c.h.b16 %v330
    %v666 = vunpack.c.l.b16 %v331
    %v667 = vunpack.c.l.b16 %v332
    %v668 = vunpack.c.h.b16 %v332
    %v669 = vunpack.c.l.b16 %v333
    %v670 = vpack.c.b16 %v481, %v478
    %v671 = vpack.c.b16 %v482, %v479
    %v672 = vpack.c.b16 %v483, %v480
    %v673 = vpack.c.b16 %v487, %v484
    %v674 = vpack.c.b16 %v488, %v485
    %v675 = vpack.c.b16 %v489, %v486
    %v676 = vpack.c.b16 %v493, %v490
    %v677 = vpack.c.b16 %v494, %v491
    %v678 = vpack.c.b16 %v495, %v492
    %v679 = vpack.c.b16 %v499, %v496
    %v680 = vpack.c.b16 %v500, %v497
    %v681 = vpack.c.b16 %v501, %v498
    %v682 = vpack.c.b16 %v505, %v502
    %v683 = vpack.c.b16 %v506, %v503
    %v684 = vpack.c.b16 %v507, %v504
    %v685 = vpack.c.b16 %v511, %v508
    %v686 = vpack.c.b16 %v512, %v509
    %v687 = vpack.c.b16 %v513, %v510
    %v688 = vpack.c.b16 %v517, %v514
    %v689 = vpack.c.b16 %v518, %v515
    %v690 = vpack.c.b16 %v519, %v516
    %v691 = vpack.c.b16 %v523, %v520
    %v692 = vpack.c.b16 %v524, %v521
    %v693 = vpack.c.b16 %v525, %v522
    %v694 = vpack.c.b16 %v529, %v526
    %v695 = vpack.c.b16 %v530, %v527
    %v696 = vpack.c.b16 %v531, %v528
    %v697 = vpack.c.b16 %v535, %v532
    %v698 = vpack.c.b16 %v536, %v533
    %v699 = vpack.c.b16 %v537, %v534
    %v700 = vpack.c.b16 %v541, %v538
    %v701 = vpack.c.b16 %v542, %v539
    %v702 = vpack.c.b16 %v543, %v540
    %v703 = vpack.c.b16 %v547, %v544
    %v704 = vpack.c.b16 %v548, %v545
    %v705 = vpack.c.b16 %v549, %v546
    %v706 = vpack.c.b16 %v553, %v550
    %v707 = vpack.c.b16 %v554, %v551
    %v708 = vpack.c.b16 %v555, %v552
    %v709 = vpack.c.b16 %v559, %v556
    %v710 = vpack.c.b16 %v560, %v557
    %v711 = vpack.c.b16 %v561, %v558
    %v712 = vpack.c.b16 %v565, %v562
    %v713 = vpack.c.b16 %v566, %v563
    %v714 = vpack.c.b16 %v567, %v564
    %v715 = vpack.c.b16 %v571, %v568
    %v716 = vpack.c.b16 %v572, %v569
    %v717 = vpack.c.b16 %v573, %v570
    %v718 = vpack.c.b16 %v577, %v574
    %v719 = vpack.c.b16 %v578, %v575
    %v720 = vpack.c.b16 %v579, %v576
    %v721 = vpack.c.b16 %v583, %v580
    %v722 = vpack.c.b16 %v584, %v581
    %v723 = vpack.c.b16 %v585, %v582
    %v724 = vpack.c.b16 %v589, %v586
    %v725 = vpack.c.b16 %v590, %v587
    %v726 = vpack.c.b16 %v591, %v588
    %v727 = vpack.c.b16 %v595, %v592
    %v728 = vpack.c.b16 %v596, %v593
    %v729 = vpack.c.b16 %v597, %v594
    %v730 = vpack.c.b16 %v601, %v598
    %v731 = vpack.c.b16 %v602, %v599
    %v732 = vpack.c.b16 %v603, %v600
    %v733 = vpack.c.b16 %v607, %v604
    %v734 = vpack.c.b16 %v608, %v605
    %v735 = vpack.c.b16 %v609, %v606
    %v736 = vpack.c.b16 %v613, %v610
    %v737 = vpack.c.b16 %v614, %v611
    %v738 = vpack.c.b16 %v615, %v612
    %v739 = vpack.c.b16 %v619, %v616
    %v740 = vpack.c.b16 %v620, %v617
    %v741 = vpack.c.b16 %v621, %v618
    %v742 = vpack.c.b16 %v625, %v622
    %v743 = vpack.c.b16 %v626, %v623
    %v744 = vpack.c.b16 %v627, %v624
    %v745 = vpack.c.b16 %v631, %v628
    %v746 = vpack.c.b16 %v632, %v629
    %v747 = vpack.c.b16 %v633, %v630
    %v748 = vpack.c.b16 %v637, %v634
    %v749 = vpack.c.b16 %v638, %v635
    %v750 = vpack.c.b16 %v639, %v636
    %v751 = vpack.c.b16 %v643, %v640
    %v752 = vpack.c.b16 %v644, %v641
    %v753 = vpack.c.b16 %v645, %v642
    %v754 = vpack.c.b16 %v649, %v646
    %v755 = vpack.c.b16 %v650, %v647
    %v756 = vpack.c.b16 %v651, %v648
    %v757 = vpack.c.b16 %v655, %v652
    %v758 = vpack.c.b16 %v656, %v653
    %v759 = vpack.c.b16 %v657, %v654
    %v760 = vpack.c.b16 %v661, %v658
    %v761 = vpack.c.b16 %v662, %v659
    %v762 = vpack.c.b16 %v663, %v660
    %v763 = vpack.c.b16 %v667, %v664
    %v764 = vpack.c.b16 %v668, %v665
    %v765 = vpack.c.b16 %v669, %v666
    %862 = vmatprep.subr.bf16.mxu0 %v671
    %863 = vmatpush1.bf16.msra.mxu0 %v670
    %864 = vmatprep.subr.bf16.mxu0 %v674
    %865 = vmatpush1.bf16.msra.mxu0 %v673
    %866 = vmatprep.subr.bf16.mxu0 %v677
    %867 = vmatpush1.bf16.msra.mxu0 %v676
    %868 = vmatprep.subr.bf16.mxu0 %v680
    %869 = vmatpush1.bf16.msra.mxu0 %v679
    %870 = vmatprep.subr.bf16.mxu0 %v683
    %871 = vmatpush1.bf16.msra.mxu0 %v682
    %872 = vmatprep.subr.bf16.mxu0 %v686
    %873 = vmatpush1.bf16.msra.mxu0 %v685
    %874 = vmatprep.subr.bf16.mxu0 %v689
    %875 = vmatpush1.bf16.msra.mxu0 %v688
    %876 = vmatprep.subr.bf16.mxu0 %v692
    %877 = vmatpush1.bf16.msra.mxu0 %v691
    %878 = vmatprep.subr.bf16.mxu0 %v695
    %879 = vmatpush1.bf16.msra.mxu0 %v694
    %880 = vmatprep.subr.bf16.mxu0 %v698
    %881 = vmatpush1.bf16.msra.mxu0 %v697
    %882 = vmatprep.subr.bf16.mxu0 %v701
    %883 = vmatpush1.bf16.msra.mxu0 %v700
    %884 = vmatprep.subr.bf16.mxu0 %v704
    %885 = vmatpush1.bf16.msra.mxu0 %v703
    %886 = vmatprep.subr.bf16.mxu0 %v707
    %887 = vmatpush1.bf16.msra.mxu0 %v706
    %888 = vmatprep.subr.bf16.mxu0 %v710
    %889 = vmatpush1.bf16.msra.mxu0 %v709
    %890 = vmatprep.subr.bf16.mxu0 %v713
    %891 = vmatpush1.bf16.msra.mxu0 %v712
    %892 = vmatprep.subr.bf16.mxu0 %v716
    %893 = vmatpush1.bf16.msra.mxu0 %v715
    %894 = vmatprep.mubr.bf16.mxu0 %v203
    %895 = vmatmul.mubr.bf16.gmra.mrb[0].mxu0 %v202
    %v896 = vpop.f32.mrb[0].mxu0
    %v897 = vadd.f32 %v338, %v896
    %v898 = vpop.f32.mrb[0].mxu0
    %v899 = vadd.f32 %v342, %v898
    %v900 = vpop.f32.mrb[0].mxu0
    %v901 = vpop.f32.mrb[0].mxu0
    %902 = vdwg.mxu0
    %903 = vmatprep.subr.bf16.mxu0 %v719
    %904 = vmatpush1.bf16.msra.mxu0 %v718
    %905 = vmatprep.subr.bf16.mxu0 %v722
    %906 = vmatpush1.bf16.msra.mxu0 %v721
    %907 = vmatprep.subr.bf16.mxu0 %v725
    %908 = vmatpush1.bf16.msra.mxu0 %v724
    %909 = vmatprep.subr.bf16.mxu0 %v728
    %910 = vmatpush1.bf16.msra.mxu0 %v727
    %911 = vmatprep.subr.bf16.mxu0 %v731
    %912 = vmatpush1.bf16.msra.mxu0 %v730
    %913 = vmatprep.subr.bf16.mxu0 %v734
    %914 = vmatpush1.bf16.msra.mxu0 %v733
    %915 = vmatprep.subr.bf16.mxu0 %v737
    %916 = vmatpush1.bf16.msra.mxu0 %v736
    %917 = vmatprep.subr.bf16.mxu0 %v740
    %918 = vmatpush1.bf16.msra.mxu0 %v739
    %919 = vmatprep.subr.bf16.mxu0 %v743
    %920 = vmatpush1.bf16.msra.mxu0 %v742
    %921 = vmatprep.subr.bf16.mxu0 %v746
    %922 = vmatpush1.bf16.msra.mxu0 %v745
    %923 = vmatprep.subr.bf16.mxu0 %v749
    %924 = vmatpush1.bf16.msra.mxu0 %v748
    %925 = vmatprep.subr.bf16.mxu0 %v752
    %926 = vmatpush1.bf16.msra.mxu0 %v751
    %927 = vmatprep.subr.bf16.mxu0 %v755
    %928 = vmatpush1.bf16.msra.mxu0 %v754
    %929 = vmatprep.subr.bf16.mxu0 %v758
    %930 = vmatpush1.bf16.msra.mxu0 %v757
    %931 = vmatprep.subr.bf16.mxu0 %v761
    %932 = vmatpush1.bf16.msra.mxu0 %v760
    %933 = vmatprep.subr.bf16.mxu0 %v764
    %934 = vmatpush1.bf16.msra.mxu0 %v763
    %935 = vmatprep.mubr.bf16.mxu0 %v205
    %936 = vmatmul.mubr.bf16.gmra.mrb[0].mxu0 %v204
    %v937 = vpop.f32.mrb[0].mxu0
    %v938 = vadd.f32 %v897, %v937
    %v939 = vpop.f32.mrb[0].mxu0
    %v940 = vadd.f32 %v899, %v939
    %v941 = vpop.f32.mrb[0].mxu0
    %v942 = vpop.f32.mrb[0].mxu0
    %943 = vdwg.mxu0
    %944 = vmatprep.subr.bf16.mxu0 0
    %945 = vmatpush1.bf16.msra.mxu0 %v672
    %946 = vmatprep.subr.bf16.mxu0 0
    %947 = vmatpush1.bf16.msra.mxu0 %v675
    %948 = vmatprep.subr.bf16.mxu0 0
    %949 = vmatpush1.bf16.msra.mxu0 %v678
    %950 = vmatprep.subr.bf16.mxu0 0
    %951 = vmatpush1.bf16.msra.mxu0 %v681
    %952 = vmatprep.subr.bf16.mxu0 0
    %953 = vmatpush1.bf16.msra.mxu0 %v684
    %954 = vmatprep.subr.bf16.mxu0 0
    %955 = vmatpush1.bf16.msra.mxu0 %v687
    %956 = vmatprep.subr.bf16.mxu0 0
    %957 = vmatpush1.bf16.msra.mxu0 %v690
    %958 = vmatprep.subr.bf16.mxu0 0
    %959 = vmatpush1.bf16.msra.mxu0 %v693
    %960 = vmatprep.subr.bf16.mxu0 0
    %961 = vmatpush1.bf16.msra.mxu0 %v696
    %962 = vmatprep.subr.bf16.mxu0 0
    %963 = vmatpush1.bf16.msra.mxu0 %v699
    %964 = vmatprep.subr.bf16.mxu0 0
    %965 = vmatpush1.bf16.msra.mxu0 %v702
    %966 = vmatprep.subr.bf16.mxu0 0
    %967 = vmatpush1.bf16.msra.mxu0 %v705
    %968 = vmatprep.subr.bf16.mxu0 0
    %969 = vmatpush1.bf16.msra.mxu0 %v708
    %970 = vmatprep.subr.bf16.mxu0 0
    %971 = vmatpush1.bf16.msra.mxu0 %v711
    %972 = vmatprep.subr.bf16.mxu0 0
    %973 = vmatpush1.bf16.msra.mxu0 %v714
    %974 = vmatprep.subr.bf16.mxu0 0
    %975 = vmatpush1.bf16.msra.mxu0 %v717
    %976 = vmatprep.mubr.bf16.mxu0 %v203
    %977 = vmatmul.mubr.bf16.gmra.mrb[0].mxu0 %v202
    %v978 = vpop.f32.mrb[0].mxu0
    %v979 = vadd.f32 %v346, %v978
    %v980 = vpop.f32.mrb[0].mxu0
    %v981 = vpop.f32.mrb[0].mxu0
    %v982 = vpop.f32.mrb[0].mxu0
    %983 = vdwg.mxu0
    %984 = vmatprep.subr.bf16.mxu0 0
    %985 = vmatpush1.bf16.msra.mxu0 %v720
    %986 = vmatprep.subr.bf16.mxu0 0
    %987 = vmatpush1.bf16.msra.mxu0 %v723
    %988 = vmatprep.subr.bf16.mxu0 0
    %989 = vmatpush1.bf16.msra.mxu0 %v726
    %990 = vmatprep.subr.bf16.mxu0 0
    %991 = vmatpush1.bf16.msra.mxu0 %v729
    %992 = vmatprep.subr.bf16.mxu0 0
    %993 = vmatpush1.bf16.msra.mxu0 %v732
    %994 = vmatprep.subr.bf16.mxu0 0
    %995 = vmatpush1.bf16.msra.mxu0 %v735
    %996 = vmatprep.subr.bf16.mxu0 0
    %997 = vmatpush1.bf16.msra.mxu0 %v738
    %998 = vmatprep.subr.bf16.mxu0 0
    %999 = vmatpush1.bf16.msra.mxu0 %v741
    %1000 = vmatprep.subr.bf16.mxu0 0
    %1001 = vmatpush1.bf16.msra.mxu0 %v744
    %1002 = vmatprep.subr.bf16.mxu0 0
    %1003 = vmatpush1.bf16.msra.mxu0 %v747
    %1004 = vmatprep.subr.bf16.mxu0 0
    %1005 = vmatpush1.bf16.msra.mxu0 %v750
    %1006 = vmatprep.subr.bf16.mxu0 0
    %1007 = vmatpush1.bf16.msra.mxu0 %v753
    %1008 = vmatprep.subr.bf16.mxu0 0
    %1009 = vmatpush1.bf16.msra.mxu0 %v756
    %1010 = vmatprep.subr.bf16.mxu0 0
    %1011 = vmatpush1.bf16.msra.mxu0 %v759
    %1012 = vmatprep.subr.bf16.mxu0 0
    %1013 = vmatpush1.bf16.msra.mxu0 %v762
    %1014 = vmatprep.subr.bf16.mxu0 0
    %1015 = vmatpush1.bf16.msra.mxu0 %v765
    %1016 = vmatprep.mubr.bf16.mxu0 %v205
    %1017 = vmatmul.mubr.bf16.gmra.mrb[0].mxu0 %v204
    %v1018 = vpop.f32.mrb[0].mxu0
    %v1019 = vadd.f32 %v979, %v1018
    %v1020 = vpop.f32.mrb[0].mxu0
    %v1021 = vpop.f32.mrb[0].mxu0
    %v1022 = vpop.f32.mrb[0].mxu0
    %1023 = vdwg.mxu0
    %v1024 = vmax.f32 %v938, 0.0
    %v1025 = vmax.f32 %v940, 0.0
    %v1026 = vmax.f32 %v1019, 0.0
    %v1027 = vpack.c.bf16 %v1024, %v1024
    %v1028 = vpack.c.bf16 %v1025, %v1025
    %v1029 = vpack.c.bf16 %v1026, %v1026
    %v1030 = vld [vmem:[#allocation6] sm:$0xf]
    %v1031 = vld [vmem:[#allocation6 + $0x4] sm:$0xf]
    %v1032 = vld [vmem:[#allocation6 + $0x8] sm:$0xf]
    %v1033 = vld [vmem:[#allocation6 + $0xc] sm:$0xf]
    %v1034 = vld [vmem:[#allocation6 + $0x10] sm:$0xf]
    %v1035 = vld [vmem:[#allocation6 + $0x14] sm:$0xf]
    %v1036 = vld [vmem:[#allocation6 + $0x18] sm:$0xf]
    %v1037 = vld [vmem:[#allocation6 + $0x1c] sm:$0xf]
    %v1038 = vld [vmem:[#allocation6 + $0x20] sm:$0xf]
    %v1039 = vld [vmem:[#allocation6 + $0x24] sm:$0xf]
    %v1040 = vld [vmem:[#allocation6 + $0x28] sm:$0xf]
    %v1041 = vld [vmem:[#allocation6 + $0x2c] sm:$0xf]
    %v1042 = vld [vmem:[#allocation6 + $0x30] sm:$0xf]
    %v1043 = vld [vmem:[#allocation6 + $0x34] sm:$0xf]
    %v1044 = vld [vmem:[#allocation6 + $0x38] sm:$0xf]
    %v1045 = vld [vmem:[#allocation6 + $0x3c] sm:$0xf]
    %v1046 = vld [vmem:[#allocation6 + $0x40] sm:$0xf]
    %v1047 = vld [vmem:[#allocation6 + $0x44] sm:$0xf]
    %v1048 = vld [vmem:[#allocation6 + $0x48] sm:$0xf]
    %v1049 = vld [vmem:[#allocation6 + $0x4c] sm:$0xf]
    %v1050 = vld [vmem:[#allocation6 + $0x50] sm:$0xf]
    %v1051 = vld [vmem:[#allocation6 + $0x54] sm:$0xf]
    %v1052 = vld [vmem:[#allocation6 + $0x58] sm:$0xf]
    %v1053 = vld [vmem:[#allocation6 + $0x5c] sm:$0xf]
    %v1054 = vld [vmem:[#allocation6 + $0x60] sm:$0xf]
    %v1055 = vld [vmem:[#allocation6 + $0x64] sm:$0xf]
    %v1056 = vld [vmem:[#allocation6 + $0x68] sm:$0xf]
    %v1057 = vld [vmem:[#allocation6 + $0x6c] sm:$0xf]
    %v1058 = vld [vmem:[#allocation6 + $0x70] sm:$0xf]
    %v1059 = vld [vmem:[#allocation6 + $0x74] sm:$0xf]
    %v1060 = vld [vmem:[#allocation6 + $0x78] sm:$0xf]
    %v1061 = vld [vmem:[#allocation6 + $0x7c] sm:$0xf]
    %v1062 = vld [vmem:[#allocation6 + $0x80] sm:$0xf]
    %v1063 = vld [vmem:[#allocation6 + $0x84] sm:$0xf]
    %v1064 = vld [vmem:[#allocation6 + $0x88] sm:$0xf]
    %v1065 = vld [vmem:[#allocation6 + $0x8c] sm:$0xf]
    %v1066 = vld [vmem:[#allocation6 + $0x90] sm:$0xf]
    %v1067 = vld [vmem:[#allocation6 + $0x94] sm:$0xf]
    %v1068 = vld [vmem:[#allocation6 + $0x98] sm:$0xf]
    %v1069 = vld [vmem:[#allocation6 + $0x9c] sm:$0xf]
    %v1070 = vld [vmem:[#allocation6 + $0xa0] sm:$0xf]
    %v1071 = vld [vmem:[#allocation6 + $0xa4] sm:$0xf]
    %v1072 = vld [vmem:[#allocation6 + $0xa8] sm:$0xf]
    %v1073 = vld [vmem:[#allocation6 + $0xac] sm:$0xf]
    %v1074 = vld [vmem:[#allocation6 + $0xb0] sm:$0xf]
    %v1075 = vld [vmem:[#allocation6 + $0xb4] sm:$0xf]
    %v1076 = vld [vmem:[#allocation6 + $0xb8] sm:$0xf]
    %v1077 = vld [vmem:[#allocation6 + $0xbc] sm:$0xf]
    %v1079 = vlaneseq
    %v1080 = vshrl.u32 %v1079, 7
    %v1081 = vsub.s32 0, %v1080
    %v1082 = vrot.slane %v66, %v1081
    %v1132 = vunpack.c.l.b16 %v1030
    %v1133 = vunpack.c.l.b16 %v1031
    %v1134 = vunpack.c.l.b16 %v1032
    %v1135 = vunpack.c.l.b16 %v1033
    %v1136 = vunpack.c.l.b16 %v1034
    %v1137 = vunpack.c.l.b16 %v1035
    %v1138 = vunpack.c.l.b16 %v1036
    %v1139 = vunpack.c.l.b16 %v1037
    %v1140 = vunpack.c.l.b16 %v1038
    %v1141 = vunpack.c.l.b16 %v1039
    %v1142 = vunpack.c.l.b16 %v1040
    %v1143 = vunpack.c.l.b16 %v1041
    %v1144 = vunpack.c.l.b16 %v1042
    %v1145 = vunpack.c.l.b16 %v1043
    %v1146 = vunpack.c.l.b16 %v1044
    %v1147 = vunpack.c.l.b16 %v1045
    %v1148 = vunpack.c.l.b16 %v1046
    %v1149 = vunpack.c.l.b16 %v1047
    %v1150 = vunpack.c.l.b16 %v1048
    %v1151 = vunpack.c.l.b16 %v1049
    %v1152 = vunpack.c.l.b16 %v1050
    %v1153 = vunpack.c.l.b16 %v1051
    %v1154 = vunpack.c.l.b16 %v1052
    %v1155 = vunpack.c.l.b16 %v1053
    %v1156 = vunpack.c.l.b16 %v1054
    %v1157 = vunpack.c.l.b16 %v1055
    %v1158 = vunpack.c.l.b16 %v1056
    %v1159 = vunpack.c.l.b16 %v1057
    %v1160 = vunpack.c.l.b16 %v1058
    %v1161 = vunpack.c.l.b16 %v1059
    %v1162 = vunpack.c.l.b16 %v1060
    %v1163 = vunpack.c.l.b16 %v1061
    %v1164 = vunpack.c.l.b16 %v1062
    %v1165 = vunpack.c.l.b16 %v1063
    %v1166 = vunpack.c.l.b16 %v1064
    %v1167 = vunpack.c.l.b16 %v1065
    %v1168 = vunpack.c.l.b16 %v1066
    %v1169 = vunpack.c.l.b16 %v1067
    %v1170 = vunpack.c.l.b16 %v1068
    %v1171 = vunpack.c.l.b16 %v1069
    %v1172 = vunpack.c.l.b16 %v1070
    %v1173 = vunpack.c.l.b16 %v1071
    %v1174 = vunpack.c.l.b16 %v1072
    %v1175 = vunpack.c.l.b16 %v1073
    %v1176 = vunpack.c.l.b16 %v1074
    %v1177 = vunpack.c.l.b16 %v1075
    %v1178 = vunpack.c.l.b16 %v1076
    %v1179 = vunpack.c.l.b16 %v1077
    %v1180 = vpack.c.b16 %v1133, %v1132
    %v1181 = vpack.c.b16 %v1135, %v1134
    %v1182 = vpack.c.b16 %v1137, %v1136
    %v1183 = vpack.c.b16 %v1139, %v1138
    %v1184 = vpack.c.b16 %v1141, %v1140
    %v1185 = vpack.c.b16 %v1143, %v1142
    %v1186 = vpack.c.b16 %v1145, %v1144
    %v1187 = vpack.c.b16 %v1147, %v1146
    %v1188 = vpack.c.b16 %v1149, %v1148
    %v1189 = vpack.c.b16 %v1151, %v1150
    %v1190 = vpack.c.b16 %v1153, %v1152
    %v1191 = vpack.c.b16 %v1155, %v1154
    %v1192 = vpack.c.b16 %v1157, %v1156
    %v1193 = vpack.c.b16 %v1159, %v1158
    %v1194 = vpack.c.b16 %v1161, %v1160
    %v1195 = vpack.c.b16 %v1163, %v1162
    %v1196 = vpack.c.b16 %v1165, %v1164
    %v1197 = vpack.c.b16 %v1167, %v1166
    %v1198 = vpack.c.b16 %v1169, %v1168
    %v1199 = vpack.c.b16 %v1171, %v1170
    %v1200 = vpack.c.b16 %v1173, %v1172
    %v1201 = vpack.c.b16 %v1175, %v1174
    %v1202 = vpack.c.b16 %v1177, %v1176
    %v1203 = vpack.c.b16 %v1179, %v1178
    %1228 = vmatprep.subr.bf16.mxu0 0
    %1229 = vmatpush1.bf16.msra.mxu0 %v1180
    %1230 = vmatprep.subr.bf16.mxu0 0
    %1231 = vmatpush1.bf16.msra.mxu0 %v1181
    %1232 = vmatprep.subr.bf16.mxu0 0
    %1233 = vmatpush1.bf16.msra.mxu0 %v1182
    %1234 = vmatprep.subr.bf16.mxu0 0
    %1235 = vmatpush1.bf16.msra.mxu0 %v1183
    %1236 = vmatprep.subr.bf16.mxu0 0
    %1237 = vmatpush1.bf16.msra.mxu0 %v1184
    %1238 = vmatprep.subr.bf16.mxu0 0
    %1239 = vmatpush1.bf16.msra.mxu0 %v1185
    %1240 = vmatprep.subr.bf16.mxu0 0
    %1241 = vmatpush1.bf16.msra.mxu0 %v1186
    %1242 = vmatprep.subr.bf16.mxu0 0
    %1243 = vmatpush1.bf16.msra.mxu0 %v1187
    %1244 = vmatprep.subr.bf16.mxu0 0
    %1245 = vmatpush1.bf16.msra.mxu0 %v1188
    %1246 = vmatprep.subr.bf16.mxu0 0
    %1247 = vmatpush1.bf16.msra.mxu0 %v1189
    %1248 = vmatprep.subr.bf16.mxu0 0
    %1249 = vmatpush1.bf16.msra.mxu0 %v1190
    %1250 = vmatprep.subr.bf16.mxu0 0
    %1251 = vmatpush1.bf16.msra.mxu0 %v1191
    %1252 = vmatprep.subr.bf16.mxu0 0
    %1253 = vmatpush1.bf16.msra.mxu0 %v1192
    %1254 = vmatprep.subr.bf16.mxu0 0
    %1255 = vmatpush1.bf16.msra.mxu0 %v1193
    %1256 = vmatprep.subr.bf16.mxu0 0
    %1257 = vmatpush1.bf16.msra.mxu0 %v1194
    %1258 = vmatprep.subr.bf16.mxu0 0
    %1259 = vmatpush1.bf16.msra.mxu0 %v1195
    %1260 = vmatprep.mubr.bf16.mxu0 %v1028
    %1261 = vmatmul.mubr.bf16.gmra.mrb[0].mxu0 %v1027
    %v1262 = vpop.f32.mrb[0].mxu0
    %v1263 = vadd.f32 %v1082, %v1262
    %v1264 = vpop.f32.mrb[0].mxu0
    %v1265 = vpop.f32.mrb[0].mxu0
    %v1266 = vpop.f32.mrb[0].mxu0
    %1267 = vdwg.mxu0
    %1268 = vmatprep.subr.bf16.mxu0 0
    %1269 = vmatpush1.bf16.msra.mxu0 %v1196
    %1270 = vmatprep.subr.bf16.mxu0 0
    %1271 = vmatpush1.bf16.msra.mxu0 %v1197
    %1272 = vmatprep.subr.bf16.mxu0 0
    %1273 = vmatpush1.bf16.msra.mxu0 %v1198
    %1274 = vmatprep.subr.bf16.mxu0 0
    %1275 = vmatpush1.bf16.msra.mxu0 %v1199
    %1276 = vmatprep.subr.bf16.mxu0 0
    %1277 = vmatpush1.bf16.msra.mxu0 %v1200
    %1278 = vmatprep.subr.bf16.mxu0 0
    %1279 = vmatpush1.bf16.msra.mxu0 %v1201
    %1280 = vmatprep.subr.bf16.mxu0 0
    %1281 = vmatpush1.bf16.msra.mxu0 %v1202
    %1282 = vmatprep.subr.bf16.mxu0 0
    %1283 = vmatpush1.bf16.msra.mxu0 %v1203
    %1284 = vmatprep.subr.bf16.mxu0 0
    %1285 = vmatpush1.bf16.msra.mxu0 0
    %1286 = vmatprep.subr.bf16.mxu0 0
    %1287 = vmatpush1.bf16.msra.mxu0 0
    %1288 = vmatprep.subr.bf16.mxu0 0
    %1289 = vmatpush1.bf16.msra.mxu0 0
    %1290 = vmatprep.subr.bf16.mxu0 0
    %1291 = vmatpush1.bf16.msra.mxu0 0
    %1292 = vmatprep.subr.bf16.mxu0 0
    %1293 = vmatpush1.bf16.msra.mxu0 0
    %1294 = vmatprep.subr.bf16.mxu0 0
    %1295 = vmatpush1.bf16.msra.mxu0 0
    %1296 = vmatprep.subr.bf16.mxu0 0
    %1297 = vmatpush1.bf16.msra.mxu0 0
    %1298 = vmatprep.subr.bf16.mxu0 0
    %1299 = vmatpush1.bf16.msra.mxu0 0
    %1300 = vmatprep.mubr.bf16.mxu0 0
    %1301 = vmatmul.mubr.bf16.gmra.mrb[0].mxu0 %v1029
    %v1302 = vpop.f32.mrb[0].mxu0
    %v1303 = vadd.f32 %v1263, %v1302
    %v1304 = vpop.f32.mrb[0].mxu0
    %v1305 = vpop.f32.mrb[0].mxu0
    %v1306 = vpop.f32.mrb[0].mxu0
    %1307 = vdwg.mxu0
    %v1308 = vtanh.pop %v1303
    %v1309 = vmul.f32 %v1308, 2.0
    %1310 = vst [vmem:[%s5] sm:$0xff] %v1309
    // Predicated region
    $region34: #{actor_forward.1} parent=1 // pred_check
      _
    $region35: #{actor_forward.1} parent=1 // pred_check_branch
      %1312 = sbr.rel (0) target = $region37
    $region36: #{actor_forward.1} parent=1 // pred_region
      _
    $region37: #{actor_forward.1} parent=1 // pred_fallthru
      _
    // Predicated region
    $region38: #{actor_forward.1} parent=1 // pred_check
      _
    $region39: #{actor_forward.1} parent=1 // pred_check_branch
      %1314 = sbr.rel (0) target = $region41
    $region40: #{actor_forward.1} parent=1 // pred_region
      _
    $region41: #{actor_forward.1} parent=1 // pred_fallthru
      _
    %1315 = vsyncpa [#allocation3], 1
    %1316 = vsyncpa [#allocation5], 1

</llo_original>
